<compile_context>
chip_gen: v6e
topology: v6e:2x2x1
jax: 0.10.0
libtpu: 0.0.40
codegen_flags: <defaults>
</compile_context>

<pallas_src>
import numpy as np

import jax
import jax.numpy as jnp
from jax import lax
from jax.experimental import pallas as pl
from jax.experimental.pallas import tpu as pltpu


def _round_up(a: int, m: int) -> int:
    return (a + m - 1) // m * m


def make_permutation(num_features: int, seed: int = 42):
    """Mirror of the PyTorch module __init__: fixed random permutation + inverse."""
    rng = np.random.RandomState(seed)
    perm = np.arange(num_features)
    rng.shuffle(perm)
    inv_perm = np.argsort(perm)
    return perm, inv_perm


def _perm_matrix(perm: np.ndarray, dtype) -> jax.Array:
    """One-hot matrix P (D, D) such that (x @ P)[:, j] == x[:, perm[j]].

    0/1 entries are exactly representable in every float dtype, so P is built
    directly in x.dtype (no in-kernel upcast needed).
    """
    d = perm.shape[0]
    p = np.zeros((d, d), dtype=np.float32)
    p[perm, np.arange(d)] = 1.0
    return jnp.asarray(p, dtype=dtype)


def _permute_kernel(x_ref, p_ref, o_ref):
    """Apply the column permutation to one batch tile.

    x_ref : (TB, D)  activation tile (native dtype)
    p_ref : (D, D)   one-hot permutation matrix (VMEM-resident across the grid)
    o_ref : (TB, D)  permuted output tile
    """
    out = jnp.dot(
        x_ref[...],
        p_ref[...],
        preferred_element_type=jnp.float32,
        # HIGHEST keeps the f32 one-hot matmul bit-exact (no bf16 truncation
        # of x on the MXU); for bf16 inputs it is the native single pass.
        precision=lax.Precision.HIGHEST,
    )
    o_ref[...] = out.astype(o_ref.dtype)


def _apply_permutation(x, perm: np.ndarray):
    """Run the Pallas kernel: returns x[:, perm] and log_det = zeros(B)."""
    B, D = x.shape
    assert perm.shape[0] == D
    itemsize = jnp.dtype(x.dtype).itemsize

    # Batch tile: large (fewer grid steps / fewer pipeline bubbles), multiple
    # of 8 sublanes, but capped at ~ceil(B/2) so the parallel axis has >= 2
    # steps for v7x's two TensorCores.  For tiny B a single full-extent tile.
    if B <= 8:
        tb = B
    else:
        tb = min(1024, _round_up(-(-B // 2), 8))

    grid = (pl.cdiv(B, tb),)

    p_mat = _perm_matrix(perm, x.dtype)

    # Correct-dtype, unpadded-shape hint for XLA's scheduler.
    cost = pl.CostEstimate(
        flops=2 * B * D * D,
        transcendentals=0,
        bytes_accessed=(2 * B * D + D * D) * itemsize,
    )

    # Only raise the scoped VMEM limit if the double-buffered x/out tiles plus
    # the resident P actually exceed the conservative default.
    cp_kwargs = dict(dimension_semantics=("parallel",))
    vmem_needed = (4 * tb * D + 2 * D * D) * itemsize  # 2x(x) + 2x(out) + 2x(P)
    if vmem_needed > 12 * 1024 * 1024:
        cp_kwargs["vmem_limit_bytes"] = min(2 * vmem_needed, 100 * 1024 * 1024)

    out = pl.pallas_call(
        _permute_kernel,
        out_shape=jax.ShapeDtypeStruct((B, D), x.dtype),
        grid=grid,
        in_specs=[
            # Batch-tiled activations; ragged last block handled by Pallas.
            pl.BlockSpec((tb, D), lambda i: (i, 0)),
            # Constant index_map -> permutation matrix stays VMEM-resident.
            pl.BlockSpec((D, D), lambda i: (0, 0)),
        ],
        out_specs=pl.BlockSpec((tb, D), lambda i: (i, 0)),
        compiler_params=pltpu.CompilerParams(**cp_kwargs),
        cost_estimate=cost,
    )(x, p_mat)

    # log-det of a permutation Jacobian is identically zero (constant, no
    # kernel work needed).
    log_det = jnp.zeros((B,), dtype=x.dtype)
    return out, log_det


def invertible_permutation_forward(x, perm: np.ndarray):
    """Equivalent of InvertiblePermutation.forward."""
    return _apply_permutation(x, perm)


def invertible_permutation_inverse(z, inv_perm: np.ndarray):
    """Equivalent of InvertiblePermutation.inverse."""
    return _apply_permutation(z, inv_perm)


if __name__ == "__main__":
    # Small shapes consistent with the module's forward: x is (B, D).
    # B = 12 with TB = 8 gives a 2-step grid with a ragged last block, which
    # exercises the masked write-back path flagged in the review.
    B, D = 12, 16
    seed = 42

    key = jax.random.PRNGKey(0)
    x = jax.random.normal(key, (B, D), jnp.float32)

    perm, inv_perm = make_permutation(D, seed=seed)

    # Forward: permute features.
    x_perm, log_det = invertible_permutation_forward(x, perm)
    x_perm = jax.block_until_ready(x_perm)
    log_det = jax.block_until_ready(log_det)

    # Inverse: undo the permutation.
    x_rec, log_det_inv = invertible_permutation_inverse(x_perm, inv_perm)
    x_rec = jax.block_until_ready(x_rec)

    # Reference (pure JAX / numpy indexing).
    ref_perm = x[:, perm]

    assert x_perm.shape == (B, D)
    assert log_det.shape == (B,)
    assert bool(jnp.all(log_det == 0)), "log_det must be zero"
    assert bool(jnp.array_equal(x_perm, ref_perm)), "forward mismatch"
    assert bool(jnp.array_equal(x_rec, x)), "inverse did not recover input"

    print("KERNEL_OK")
</pallas_src>

<mosaic_0001>
module attributes {stable_mosaic.version = 11 : i64} {
  func.func @_permute_kernel(%arg0: i32, %arg1: memref<8x16xf32, #tpu.memory_space<vmem>>, %arg2: memref<16x16xf32, #tpu.memory_space<vmem>>, %arg3: memref<8x16xf32, #tpu.memory_space<vmem>>) attributes {dimension_semantics = [#tpu.dimension_semantics<parallel>], iteration_bounds = array<i64: 2>, scalar_prefetch = 0 : i64, scratch_operands = 0 : i64, tpu.core_type = #tpu.core_type<tc>, window_params = [{transform_indices = @transform_0, window_bounds = array<i64: 8, 16>}, {pipeline_mode = #tpu.pipeline_mode<synchronous>, transform_indices = @transform_1, window_bounds = array<i64: 16, 16>}, {transform_indices = @transform_2, window_bounds = array<i64: 8, 16>}]} {
    %c0 = arith.constant 0 : index
    %c0_0 = arith.constant 0 : index
    %0 = vector.load %arg1[%c0, %c0_0] : memref<8x16xf32, #tpu.memory_space<vmem>>, vector<8x16xf32>
    %c0_1 = arith.constant 0 : index
    %c0_2 = arith.constant 0 : index
    %1 = vector.load %arg2[%c0_1, %c0_2] : memref<16x16xf32, #tpu.memory_space<vmem>>, vector<16x16xf32>
    %cst = arith.constant dense<0.000000e+00> : vector<8x16xf32>
    %2 = tpu.matmul %0, %1, %cst {dimension_numbers = #tpu.dot_dimension_numbers<[1], [0], [0], [1], [0, 0, 1, 1], [], []>, precision = #tpu.contract_precision<fp32>} : vector<8x16xf32>, vector<16x16xf32>, vector<8x16xf32> -> vector<8x16xf32>
    %c0_3 = arith.constant 0 : index
    %c0_4 = arith.constant 0 : index
    %3 = vector.load %arg3[%c0_3, %c0_4] : memref<8x16xf32, #tpu.memory_space<vmem>>, vector<8x16xf32>
    tpu.vector_store %arg3[%c0_3, %c0_4], %2 {strides = array<i32>} : memref<8x16xf32, #tpu.memory_space<vmem>>, vector<8x16xf32>,
    return
  }
  func.func @transform_0(%arg0: i32) -> (i32, i32) {
    %c0_i32 = arith.constant 0 : i32
    %c0_i32_0 = arith.constant 0 : i32
    return %arg0, %c0_i32 : i32, i32
  }
  func.func @transform_1(%arg0: i32) -> (i32, i32) {
    %c0_i32 = arith.constant 0 : i32
    %c0_i32_0 = arith.constant 0 : i32
    %c0_i32_1 = arith.constant 0 : i32
    return %c0_i32, %c0_i32_0 : i32, i32
  }
  func.func @transform_2(%arg0: i32) -> (i32, i32) {
    %c0_i32 = arith.constant 0 : i32
    %c0_i32_0 = arith.constant 0 : i32
    return %arg0, %c0_i32 : i32, i32
  }
}

</mosaic_0001>

<llo_original>
// kernel: tpu_custom_call.1
$region0: #{tpu_custom_call.1}
  #allocation0 [shape = 'u32[]', space=smem, size = 0x4, offset = 0x4, fixed_abs, tag = 'smem constant byte address 0x4 - core index']
  #allocation1 [shape = 'u32[144,128]{1,0:T(1,128)}', space=vmem, size = 0x12000, scoped, tag = 'internal scratch']
  %s0 = inlined_call_operand.hbm [shape: f32[12,16], index: 0, kind: input, shape index: {}]
  %s1 = inlined_call_operand.hbm [shape: f32[16,16], index: 1, kind: input, shape index: {}]
  %s2 = inlined_call_operand.hbm [shape: f32[12,16], index: 2, kind: output, shape index: {}]
  %s3 = sld [smem:[#allocation0]]
  $region49: #{tpu_custom_call.1} parent=0
    _
  %s5 = ssub.s32 1, %s3
  %s6 = scalar_select 0, %s5, %s3
  $region1: #{tpu_custom_call.1} parent=0
    #allocation2 [shape = 'u8[8192]{0}', space=vmem, size = 0x2000, scoped, tag = 'input window, operand 0']
    #allocation3 [shape = 's32[2]{0}', space=sflag, size = 0x8, scoped, tag = 'scoped memory for tpu_custom_call.1']
    #allocation4 [shape = 's32[2]{0}', space=sflag, size = 0x8, scoped, tag = 'scoped memory for tpu_custom_call.1']
    #allocation5 [shape = 'u8[8192]{0}', space=vmem, size = 0x2000, scoped, tag = 'input window, operand 1, single buffered']
    #allocation6 [shape = 's32[1]{0}', space=sflag, size = 0x4, scoped, tag = 'scoped memory for tpu_custom_call.1']
    #allocation7 [shape = 'u8[8192]{0}', space=vmem, size = 0x2000, scoped, tag = 'output window, operand 0']
    %7 = vsyncpa [#allocation3], 0
    %s8 = scalar_lea.sflag [#allocation3], 1
    %9 = vsyncpa %s8, 0
    %10 = vsyncpa [#allocation6], 0
    %11 = vsyncpa [#allocation4], 0
    %s12 = scalar_lea.sflag [#allocation4], 1
    %13 = vsyncpa %s12, 0
    loop: start=0, step=1, limit=4
    $region2: #{tpu_custom_call.1} parent=1 // loop_pre_header
      _
    $region3: #{tpu_custom_call.1} parent=1 // loop_header
      %s15 = sphi 0, %s19
      %p16 = scmp.ge.s32.totalorder %s15, 4
      %s25 = sphi 0, %s27
      %s28 = sphi 0, %s25
      %s29 = sphi 0, %s28
      %s45 = sphi 0, %s29
      %s49 = sphi 0, %s49
      %s51 = sphi 0, %s49
      %s52 = sphi 0, %s51
      %s66 = sphi 0, %s52
      %s72 = sphi 0, %s74
      %s75 = sphi 0, %s72
      %s76 = sphi 0, %s75
      %s92 = sphi 0, %s76
    $region4: #{tpu_custom_call.1} parent=1 // loop_header_branch
      %18 = sbr.rel (%p16) target = $region8
    $region5: #{tpu_custom_call.1} parent=1 // loop_body
      %s20 = ssub.s32 %s15, 1
      %s21 = ssub.s32 %s15, 2
      %s22 = sadd.s32 %s15, 1
      %s23 = ssub.s32 %s15, %s22
      %p24 = scmp.eq.s32.totalorder %s23, 0
      %s26 = sadd.s32 %s25, 1
      %s27 = scalar_select %p24, %s25, %s26
      %p30 = pneg %p24
      %p31 = scmp.eq.s32.totalorder %s15, 1
      %p32 = por %p30, %p31
      %p33 = scmp.ne.s32.totalorder %s25, %s28
      %p34 = scmp.eq.s32.totalorder %s15, 0
      %p35 = por %p33, %p34
      %p36 = scmp.ne.s32.totalorder %s25, %s28
      %p37 = scmp.eq.s32.totalorder %s20, 1
      %p38 = por %p36, %p37
      %p39 = scmp.ne.s32.totalorder %s28, %s29
      %p40 = scmp.eq.s32.totalorder %s20, 0
      %p41 = por %p39, %p40
      %p42 = scmp.ne.s32.totalorder %s28, %s29
      %p43 = scmp.eq.s32.totalorder %s21, 1
      %p44 = por %p42, %p43
      %p46 = scmp.ne.s32.totalorder %s29, %s45
      %p47 = scmp.eq.s32.totalorder %s21, 0
      %p48 = por %p46, %p47
      %s50 = sadd.s32 %s49, 1
      %p53 = scmp.eq.s32.totalorder %s15, 1
      %p54 = scmp.ne.s32.totalorder %s49, %s51
      %p55 = scmp.eq.s32.totalorder %s15, 0
      %p56 = por %p54, %p55
      %p57 = scmp.ne.s32.totalorder %s49, %s51
      %p58 = scmp.eq.s32.totalorder %s20, 1
      %p59 = por %p57, %p58
      %p60 = scmp.ne.s32.totalorder %s51, %s52
      %p61 = scmp.eq.s32.totalorder %s20, 0
      %p62 = por %p60, %p61
      %p63 = scmp.ne.s32.totalorder %s51, %s52
      %p64 = scmp.eq.s32.totalorder %s21, 1
      %p65 = por %p63, %p64
      %p67 = scmp.ne.s32.totalorder %s52, %s66
      %p68 = scmp.eq.s32.totalorder %s21, 0
      %p69 = por %p67, %p68
      %s70 = ssub.s32 %s15, %s22
      %p71 = scmp.eq.s32.totalorder %s70, 0
      %s73 = sadd.s32 %s72, 1
      %s74 = scalar_select %p71, %s72, %s73
      %p77 = pneg %p71
      %p78 = scmp.eq.s32.totalorder %s15, 1
      %p79 = por %p77, %p78
      %p80 = scmp.ne.s32.totalorder %s72, %s75
      %p81 = scmp.eq.s32.totalorder %s15, 0
      %p82 = por %p80, %p81
      %p83 = scmp.ne.s32.totalorder %s72, %s75
      %p84 = scmp.eq.s32.totalorder %s20, 1
      %p85 = por %p83, %p84
      %p86 = scmp.ne.s32.totalorder %s75, %s76
      %p87 = scmp.eq.s32.totalorder %s20, 0
      %p88 = por %p86, %p87
      %p89 = scmp.ne.s32.totalorder %s75, %s76
      %p90 = scmp.eq.s32.totalorder %s21, 1
      %p91 = por %p89, %p90
      %p93 = scmp.ne.s32.totalorder %s76, %s92
      %p94 = scmp.eq.s32.totalorder %s21, 0
      %p95 = por %p93, %p94
      %p96 = scmp.le.s32.totalorder 1, %s15
      %p97 = scmp.lt.s32.totalorder %s15, 3
      %p98 = pnand %p96, %p97
      %p99 = pneg %p98
      // Predicated region
      $region9: #{tpu_custom_call.1} parent=5 // pred_check
        _
      $region10: #{tpu_custom_call.1} parent=5 // pred_check_branch
        %101 = sbr.rel (%p98) target = $region12
      $region11: #{tpu_custom_call.1} parent=5 // pred_region
        %s102 = ssub.s32 %s15, 1
        // Predicated region
        $region13: #{tpu_custom_call.1} parent=11 // pred_check
          %p103 = pneg %p62
        $region14: #{tpu_custom_call.1} parent=11 // pred_check_branch
          %105 = sbr.rel (%p103) target = $region16
        $region15: #{tpu_custom_call.1} parent=11 // pred_region
          %s107 = ssub.s32 256, 256
          %108 = vsyncadd [#allocation6], %s107
          %s109 = sshll.u32 [#allocation5], 4
          %s110 = int_to_ptr.vmem [resolvable:$true] %s109
          %115 = dma.hbm_to_vmem [thread:$0]  %s1, 256, %s110, [#allocation6], 128, 128, 8
        $region16: #{tpu_custom_call.1} parent=11 // pred_fallthru
          _
      $region12: #{tpu_custom_call.1} parent=5 // pred_fallthru
        _
      %p116 = scmp.lt.s32.totalorder %s15, 2
      // Predicated region
      $region17: #{tpu_custom_call.1} parent=5 // pred_check
        %p117 = pneg %p116
      $region18: #{tpu_custom_call.1} parent=5 // pred_check_branch
        %119 = sbr.rel (%p117) target = $region20
      $region19: #{tpu_custom_call.1} parent=5 // pred_region
        // Predicated region
        $region21: #{tpu_custom_call.1} parent=19 // pred_check
          %p120 = pneg %p35
        $region22: #{tpu_custom_call.1} parent=19 // pred_check_branch
          %122 = sbr.rel (%p120) target = $region24
        $region23: #{tpu_custom_call.1} parent=19 // pred_region
          %s123 = sand.u32 %s25, 1
          %s124 = scalar_lea.sflag [#allocation3], %s123
          %s125 = sand.u32 %s25, 1
          %s126 = smul.addr %s125, 8
          %s127 = scalar_lea.vmem [#allocation2], %s126
          %s129 = ssub.s32 128, 128
          %130 = vsyncadd %s124, %s129
          %s131 = smul.addr %s15, 128
          %s132 = scalar_lea.hbm %s0, %s131
          %s134 = sshll.u32 %s127, 4
          %s135 = int_to_ptr.vmem [resolvable:$true] %s134
          %137 = dma.hbm_to_vmem [thread:$0]  %s132, 128, %s135, %s124
        $region24: #{tpu_custom_call.1} parent=19 // pred_fallthru
          _
      $region20: #{tpu_custom_call.1} parent=5 // pred_fallthru
        _
      %p138 = scmp.le.s32.totalorder 1, %s15
      %p139 = scmp.lt.s32.totalorder %s15, 3
      %p140 = pnand %p138, %p139
      %p141 = pneg %p140
      // Predicated region
      $region25: #{tpu_custom_call.1} parent=5 // pred_check
        _
      $region26: #{tpu_custom_call.1} parent=5 // pred_check_branch
        %143 = sbr.rel (%p140) target = $region28
      $region27: #{tpu_custom_call.1} parent=5 // pred_region
        %s144 = ssub.s32 %s15, 1
        %s145 = sand.u32 %s28, 1
        %s146 = scalar_lea.sflag [#allocation3], %s145
        %s147 = sand.u32 %s28, 1
        %s148 = smul.addr %s147, 8
        %s149 = scalar_lea.vmem [#allocation2], %s148
        // Predicated region
        $region29: #{tpu_custom_call.1} parent=27 // pred_check
          %p150 = pneg %p41
        $region30: #{tpu_custom_call.1} parent=27 // pred_check_branch
          %152 = sbr.rel (%p150) target = $region32
        $region31: #{tpu_custom_call.1} parent=27 // pred_region
          %153 = dma.done %s146, 128
        $region32: #{tpu_custom_call.1} parent=27 // pred_fallthru
          _
        // Predicated region
        $region33: #{tpu_custom_call.1} parent=27 // pred_check
          %p154 = pneg %p62
        $region34: #{tpu_custom_call.1} parent=27 // pred_check_branch
          %156 = sbr.rel (%p154) target = $region36
        $region35: #{tpu_custom_call.1} parent=27 // pred_region
          %157 = dma.done [#allocation6], 256
        $region36: #{tpu_custom_call.1} parent=27 // pred_fallthru
          _
        %s158 = sand.u32 %s28, 1
        %s159 = scalar_lea.sflag [#allocation3], %s158
        %s160 = sand.u32 %s28, 1
        %s161 = smul.addr %s160, 8
        %s162 = scalar_lea.vmem [#allocation2], %s161
        %p163 = pneg %p41
        %p164 = pneg %p38
        %p165 = pneg %p62
        %p166 = pneg %p59
        %p167 = pneg %p88
        %p168 = pneg %p85
        %s169 = sand.u32 %s75, 1
        %s170 = scalar_lea.sflag [#allocation4], %s169
        %s171 = sand.u32 %s75, 1
        %s172 = smul.addr %s171, 8
        %s173 = scalar_lea.vmem [#allocation7], %s172
        %v174 = vld [vmem:[%s149] sm:$0xff]
        %v175 = vld [vmem:[#allocation5] sm:$0xff]
        %v176 = vld [vmem:[#allocation5 + $0x8] sm:$0xff]
        %vm177 = vcmask 130048
        %v179 = vsel %vm177, %v174, 0
        %181 = vmatprep.subr.mxu0 0.0
        %182 = vmatpush1.msra.mxu0 0.0
        %183 = vmatprep.subr.mxu0 0.0
        %184 = vmatpush1.msra.mxu0 0.0
        %185 = vmatprep.subr.mxu0 0.0
        %186 = vmatpush1.msra.mxu0 0.0
        %187 = vmatprep.subr.mxu0 0.0
        %188 = vmatpush1.msra.mxu0 0.0
        %189 = vmatprep.subr.mxu0 0.0
        %190 = vmatpush1.msra.mxu0 0.0
        %191 = vmatprep.subr.mxu0 0.0
        %192 = vmatpush1.msra.mxu0 0.0
        %193 = vmatprep.subr.mxu0 0.0
        %194 = vmatpush1.msra.mxu0 0.0
        %195 = vmatprep.subr.mxu0 0.0
        %196 = vmatpush1.msra.mxu0 0.0
        %197 = vmatprep.subr.mxu0 0.0
        %198 = vmatpush1.msra.mxu0 0.0
        %199 = vmatprep.subr.mxu0 0.0
        %200 = vmatpush1.msra.mxu0 0.0
        %201 = vmatprep.subr.mxu0 0.0
        %202 = vmatpush1.msra.mxu0 0.0
        %203 = vmatprep.subr.mxu0 0.0
        %204 = vmatpush1.msra.mxu0 0.0
        %205 = vmatprep.subr.mxu0 0.0
        %206 = vmatpush1.msra.mxu0 0.0
        %207 = vmatprep.subr.mxu0 0.0
        %208 = vmatpush1.msra.mxu0 0.0
        %209 = vmatprep.subr.mxu0 0.0
        %v210 = vand.u32 %v176, 4294901760
        %211 = vmatpush1.msra.mxu0 %v210
        %212 = vmatprep.subr.mxu0 0.0
        %v213 = vand.u32 %v175, 4294901760
        %214 = vmatpush1.msra.mxu0 %v213
        %215 = vmatprep.subr.mxu0 0.0
        %216 = vmatpush2.msra.mxu0 0.0
        %217 = vmatprep.subr.mxu0 0.0
        %218 = vmatpush2.msra.mxu0 0.0
        %219 = vmatprep.subr.mxu0 0.0
        %220 = vmatpush2.msra.mxu0 0.0
        %221 = vmatprep.subr.mxu0 0.0
        %222 = vmatpush2.msra.mxu0 0.0
        %223 = vmatprep.subr.mxu0 0.0
        %224 = vmatpush2.msra.mxu0 0.0
        %225 = vmatprep.subr.mxu0 0.0
        %226 = vmatpush2.msra.mxu0 0.0
        %227 = vmatprep.subr.mxu0 0.0
        %228 = vmatpush2.msra.mxu0 0.0
        %229 = vmatprep.subr.mxu0 0.0
        %230 = vmatpush2.msra.mxu0 0.0
        %231 = vmatprep.subr.mxu0 0.0
        %232 = vmatpush2.msra.mxu0 0.0
        %233 = vmatprep.subr.mxu0 0.0
        %234 = vmatpush2.msra.mxu0 0.0
        %235 = vmatprep.subr.mxu0 0.0
        %236 = vmatpush2.msra.mxu0 0.0
        %237 = vmatprep.subr.mxu0 0.0
        %238 = vmatpush2.msra.mxu0 0.0
        %239 = vmatprep.subr.mxu0 0.0
        %240 = vmatpush2.msra.mxu0 0.0
        %241 = vmatprep.subr.mxu0 0.0
        %242 = vmatpush2.msra.mxu0 0.0
        %243 = vmatprep.subr.mxu0 0.0
        %244 = vmatpush2.msra.mxu0 0.0
        %245 = vmatprep.subr.mxu0 0.0
        %246 = vmatpush2.msra.mxu0 0.0
        %247 = vmatprep.mubr.f32.mxu0 0.0
        %v248 = vand.u32 %v179, 4294901760
        %v249 = vsub.f32 %v179, %v248
        %v250 = vand.u32 %v249, 4294901760
        %v251 = vsub.f32 %v249, %v250
        %v252 = vand.u32 %v251, 4294901760
        %253 = vmatmul.mubr.f32.gmra.mxu0 %v252
        %v254 = vpop.f32.mrf.mxu0
        %v255 = vadd.f32 0.0, %v254
        %v256 = vpop.f32.mrf.mxu0
        %257 = vdwg.mxu0
        %258 = vmatprep.subr.mxu0 0.0
        %259 = vmatpush1.msra.mxu0 0.0
        %260 = vmatprep.subr.mxu0 0.0
        %261 = vmatpush1.msra.mxu0 0.0
        %262 = vmatprep.subr.mxu0 0.0
        %263 = vmatpush1.msra.mxu0 0.0
        %264 = vmatprep.subr.mxu0 0.0
        %265 = vmatpush1.msra.mxu0 0.0
        %266 = vmatprep.subr.mxu0 0.0
        %267 = vmatpush1.msra.mxu0 0.0
        %268 = vmatprep.subr.mxu0 0.0
        %269 = vmatpush1.msra.mxu0 0.0
        %270 = vmatprep.subr.mxu0 0.0
        %271 = vmatpush1.msra.mxu0 0.0
        %272 = vmatprep.subr.mxu0 0.0
        %273 = vmatpush1.msra.mxu0 0.0
        %274 = vmatprep.subr.mxu0 0.0
        %275 = vmatpush1.msra.mxu0 0.0
        %276 = vmatprep.subr.mxu0 0.0
        %277 = vmatpush1.msra.mxu0 0.0
        %278 = vmatprep.subr.mxu0 0.0
        %279 = vmatpush1.msra.mxu0 0.0
        %280 = vmatprep.subr.mxu0 0.0
        %281 = vmatpush1.msra.mxu0 0.0
        %282 = vmatprep.subr.mxu0 0.0
        %283 = vmatpush1.msra.mxu0 0.0
        %284 = vmatprep.subr.mxu0 0.0
        %285 = vmatpush1.msra.mxu0 0.0
        %286 = vmatprep.subr.mxu0 0.0
        %v287 = vand.u32 %v176, 4294901760
        %v288 = vsub.f32 %v176, %v287
        %v289 = vand.u32 %v288, 4294901760
        %v290 = vsub.f32 %v288, %v289
        %v291 = vand.u32 %v290, 4294901760
        %292 = vmatpush1.msra.mxu0 %v291
        %293 = vmatprep.subr.mxu0 0.0
        %v294 = vand.u32 %v175, 4294901760
        %v295 = vsub.f32 %v175, %v294
        %v296 = vand.u32 %v295, 4294901760
        %v297 = vsub.f32 %v295, %v296
        %v298 = vand.u32 %v297, 4294901760
        %299 = vmatpush1.msra.mxu0 %v298
        %300 = vmatprep.subr.mxu0 0.0
        %301 = vmatpush2.msra.mxu0 0.0
        %302 = vmatprep.subr.mxu0 0.0
        %303 = vmatpush2.msra.mxu0 0.0
        %304 = vmatprep.subr.mxu0 0.0
        %305 = vmatpush2.msra.mxu0 0.0
        %306 = vmatprep.subr.mxu0 0.0
        %307 = vmatpush2.msra.mxu0 0.0
        %308 = vmatprep.subr.mxu0 0.0
        %309 = vmatpush2.msra.mxu0 0.0
        %310 = vmatprep.subr.mxu0 0.0
        %311 = vmatpush2.msra.mxu0 0.0
        %312 = vmatprep.subr.mxu0 0.0
        %313 = vmatpush2.msra.mxu0 0.0
        %314 = vmatprep.subr.mxu0 0.0
        %315 = vmatpush2.msra.mxu0 0.0
        %316 = vmatprep.subr.mxu0 0.0
        %317 = vmatpush2.msra.mxu0 0.0
        %318 = vmatprep.subr.mxu0 0.0
        %319 = vmatpush2.msra.mxu0 0.0
        %320 = vmatprep.subr.mxu0 0.0
        %321 = vmatpush2.msra.mxu0 0.0
        %322 = vmatprep.subr.mxu0 0.0
        %323 = vmatpush2.msra.mxu0 0.0
        %324 = vmatprep.subr.mxu0 0.0
        %325 = vmatpush2.msra.mxu0 0.0
        %326 = vmatprep.subr.mxu0 0.0
        %327 = vmatpush2.msra.mxu0 0.0
        %328 = vmatprep.subr.mxu0 0.0
        %329 = vmatpush2.msra.mxu0 0.0
        %330 = vmatprep.subr.mxu0 0.0
        %331 = vmatpush2.msra.mxu0 0.0
        %332 = vmatprep.mubr.f32.mxu0 0.0
        %v333 = vand.u32 %v179, 4294901760
        %334 = vmatmul.mubr.f32.gmra.mxu0 %v333
        %v335 = vpop.f32.mrf.mxu0
        %v336 = vadd.f32 %v255, %v335
        %v337 = vpop.f32.mrf.mxu0
        %338 = vdwg.mxu0
        %339 = vmatprep.subr.mxu0 0.0
        %340 = vmatpush1.msra.mxu0 0.0
        %341 = vmatprep.subr.mxu0 0.0
        %342 = vmatpush1.msra.mxu0 0.0
        %343 = vmatprep.subr.mxu0 0.0
        %344 = vmatpush1.msra.mxu0 0.0
        %345 = vmatprep.subr.mxu0 0.0
        %346 = vmatpush1.msra.mxu0 0.0
        %347 = vmatprep.subr.mxu0 0.0
        %348 = vmatpush1.msra.mxu0 0.0
        %349 = vmatprep.subr.mxu0 0.0
        %350 = vmatpush1.msra.mxu0 0.0
        %351 = vmatprep.subr.mxu0 0.0
        %352 = vmatpush1.msra.mxu0 0.0
        %353 = vmatprep.subr.mxu0 0.0
        %354 = vmatpush1.msra.mxu0 0.0
        %355 = vmatprep.subr.mxu0 0.0
        %356 = vmatpush1.msra.mxu0 0.0
        %357 = vmatprep.subr.mxu0 0.0
        %358 = vmatpush1.msra.mxu0 0.0
        %359 = vmatprep.subr.mxu0 0.0
        %360 = vmatpush1.msra.mxu0 0.0
        %361 = vmatprep.subr.mxu0 0.0
        %362 = vmatpush1.msra.mxu0 0.0
        %363 = vmatprep.subr.mxu0 0.0
        %364 = vmatpush1.msra.mxu0 0.0
        %365 = vmatprep.subr.mxu0 0.0
        %366 = vmatpush1.msra.mxu0 0.0
        %367 = vmatprep.subr.mxu0 0.0
        %v368 = vand.u32 %v176, 4294901760
        %v369 = vsub.f32 %v176, %v368
        %370 = vmatpush1.msra.mxu0 %v369
        %371 = vmatprep.subr.mxu0 0.0
        %v372 = vand.u32 %v175, 4294901760
        %v373 = vsub.f32 %v175, %v372
        %374 = vmatpush1.msra.mxu0 %v373
        %375 = vmatprep.subr.mxu0 0.0
        %376 = vmatpush2.msra.mxu0 0.0
        %377 = vmatprep.subr.mxu0 0.0
        %378 = vmatpush2.msra.mxu0 0.0
        %379 = vmatprep.subr.mxu0 0.0
        %380 = vmatpush2.msra.mxu0 0.0
        %381 = vmatprep.subr.mxu0 0.0
        %382 = vmatpush2.msra.mxu0 0.0
        %383 = vmatprep.subr.mxu0 0.0
        %384 = vmatpush2.msra.mxu0 0.0
        %385 = vmatprep.subr.mxu0 0.0
        %386 = vmatpush2.msra.mxu0 0.0
        %387 = vmatprep.subr.mxu0 0.0
        %388 = vmatpush2.msra.mxu0 0.0
        %389 = vmatprep.subr.mxu0 0.0
        %390 = vmatpush2.msra.mxu0 0.0
        %391 = vmatprep.subr.mxu0 0.0
        %392 = vmatpush2.msra.mxu0 0.0
        %393 = vmatprep.subr.mxu0 0.0
        %394 = vmatpush2.msra.mxu0 0.0
        %395 = vmatprep.subr.mxu0 0.0
        %396 = vmatpush2.msra.mxu0 0.0
        %397 = vmatprep.subr.mxu0 0.0
        %398 = vmatpush2.msra.mxu0 0.0
        %399 = vmatprep.subr.mxu0 0.0
        %400 = vmatpush2.msra.mxu0 0.0
        %401 = vmatprep.subr.mxu0 0.0
        %402 = vmatpush2.msra.mxu0 0.0
        %403 = vmatprep.subr.mxu0 0.0
        %404 = vmatpush2.msra.mxu0 0.0
        %405 = vmatprep.subr.mxu0 0.0
        %406 = vmatpush2.msra.mxu0 0.0
        %407 = vmatprep.mubr.f32.mxu0 0.0
        %v408 = vand.u32 %v179, 4294901760
        %v409 = vsub.f32 %v179, %v408
        %410 = vmatmul.mubr.f32.gmra.mxu0 %v409
        %v411 = vpop.f32.mrf.mxu0
        %v412 = vadd.f32 %v336, %v411
        %v413 = vpop.f32.mrf.mxu0
        %414 = vdwg.mxu0
        %415 = vmatprep.subr.mxu0 0.0
        %416 = vmatpush1.msra.mxu0 0.0
        %417 = vmatprep.subr.mxu0 0.0
        %418 = vmatpush1.msra.mxu0 0.0
        %419 = vmatprep.subr.mxu0 0.0
        %420 = vmatpush1.msra.mxu0 0.0
        %421 = vmatprep.subr.mxu0 0.0
        %422 = vmatpush1.msra.mxu0 0.0
        %423 = vmatprep.subr.mxu0 0.0
        %424 = vmatpush1.msra.mxu0 0.0
        %425 = vmatprep.subr.mxu0 0.0
        %426 = vmatpush1.msra.mxu0 0.0
        %427 = vmatprep.subr.mxu0 0.0
        %428 = vmatpush1.msra.mxu0 0.0
        %429 = vmatprep.subr.mxu0 0.0
        %430 = vmatpush1.msra.mxu0 0.0
        %431 = vmatprep.subr.mxu0 0.0
        %432 = vmatpush1.msra.mxu0 0.0
        %433 = vmatprep.subr.mxu0 0.0
        %434 = vmatpush1.msra.mxu0 0.0
        %435 = vmatprep.subr.mxu0 0.0
        %436 = vmatpush1.msra.mxu0 0.0
        %437 = vmatprep.subr.mxu0 0.0
        %438 = vmatpush1.msra.mxu0 0.0
        %439 = vmatprep.subr.mxu0 0.0
        %440 = vmatpush1.msra.mxu0 0.0
        %441 = vmatprep.subr.mxu0 0.0
        %442 = vmatpush1.msra.mxu0 0.0
        %443 = vmatprep.subr.mxu0 0.0
        %v444 = vand.u32 %v176, 4294901760
        %445 = vmatpush1.msra.mxu0 %v444
        %446 = vmatprep.subr.mxu0 0.0
        %v447 = vand.u32 %v175, 4294901760
        %448 = vmatpush1.msra.mxu0 %v447
        %449 = vmatprep.subr.mxu0 0.0
        %450 = vmatpush2.msra.mxu0 0.0
        %451 = vmatprep.subr.mxu0 0.0
        %452 = vmatpush2.msra.mxu0 0.0
        %453 = vmatprep.subr.mxu0 0.0
        %454 = vmatpush2.msra.mxu0 0.0
        %455 = vmatprep.subr.mxu0 0.0
        %456 = vmatpush2.msra.mxu0 0.0
        %457 = vmatprep.subr.mxu0 0.0
        %458 = vmatpush2.msra.mxu0 0.0
        %459 = vmatprep.subr.mxu0 0.0
        %460 = vmatpush2.msra.mxu0 0.0
        %461 = vmatprep.subr.mxu0 0.0
        %462 = vmatpush2.msra.mxu0 0.0
        %463 = vmatprep.subr.mxu0 0.0
        %464 = vmatpush2.msra.mxu0 0.0
        %465 = vmatprep.subr.mxu0 0.0
        %466 = vmatpush2.msra.mxu0 0.0
        %467 = vmatprep.subr.mxu0 0.0
        %468 = vmatpush2.msra.mxu0 0.0
        %469 = vmatprep.subr.mxu0 0.0
        %470 = vmatpush2.msra.mxu0 0.0
        %471 = vmatprep.subr.mxu0 0.0
        %472 = vmatpush2.msra.mxu0 0.0
        %473 = vmatprep.subr.mxu0 0.0
        %474 = vmatpush2.msra.mxu0 0.0
        %475 = vmatprep.subr.mxu0 0.0
        %476 = vmatpush2.msra.mxu0 0.0
        %477 = vmatprep.subr.mxu0 0.0
        %478 = vmatpush2.msra.mxu0 0.0
        %479 = vmatprep.subr.mxu0 0.0
        %480 = vmatpush2.msra.mxu0 0.0
        %481 = vmatprep.mubr.f32.mxu0 0.0
        %v482 = vand.u32 %v179, 4294901760
        %v483 = vsub.f32 %v179, %v482
        %v484 = vand.u32 %v483, 4294901760
        %485 = vmatmul.mubr.f32.gmra.mxu0 %v484
        %v486 = vpop.f32.mrf.mxu0
        %v487 = vadd.f32 %v412, %v486
        %v488 = vpop.f32.mrf.mxu0
        %489 = vdwg.mxu0
        %490 = vmatprep.subr.mxu0 0.0
        %491 = vmatpush1.msra.mxu0 0.0
        %492 = vmatprep.subr.mxu0 0.0
        %493 = vmatpush1.msra.mxu0 0.0
        %494 = vmatprep.subr.mxu0 0.0
        %495 = vmatpush1.msra.mxu0 0.0
        %496 = vmatprep.subr.mxu0 0.0
        %497 = vmatpush1.msra.mxu0 0.0
        %498 = vmatprep.subr.mxu0 0.0
        %499 = vmatpush1.msra.mxu0 0.0
        %500 = vmatprep.subr.mxu0 0.0
        %501 = vmatpush1.msra.mxu0 0.0
        %502 = vmatprep.subr.mxu0 0.0
        %503 = vmatpush1.msra.mxu0 0.0
        %504 = vmatprep.subr.mxu0 0.0
        %505 = vmatpush1.msra.mxu0 0.0
        %506 = vmatprep.subr.mxu0 0.0
        %507 = vmatpush1.msra.mxu0 0.0
        %508 = vmatprep.subr.mxu0 0.0
        %509 = vmatpush1.msra.mxu0 0.0
        %510 = vmatprep.subr.mxu0 0.0
        %511 = vmatpush1.msra.mxu0 0.0
        %512 = vmatprep.subr.mxu0 0.0
        %513 = vmatpush1.msra.mxu0 0.0
        %514 = vmatprep.subr.mxu0 0.0
        %515 = vmatpush1.msra.mxu0 0.0
        %516 = vmatprep.subr.mxu0 0.0
        %517 = vmatpush1.msra.mxu0 0.0
        %518 = vmatprep.subr.mxu0 0.0
        %v519 = vand.u32 %v176, 4294901760
        %v520 = vsub.f32 %v176, %v519
        %v521 = vand.u32 %v520, 4294901760
        %522 = vmatpush1.msra.mxu0 %v521
        %523 = vmatprep.subr.mxu0 0.0
        %v524 = vand.u32 %v175, 4294901760
        %v525 = vsub.f32 %v175, %v524
        %v526 = vand.u32 %v525, 4294901760
        %527 = vmatpush1.msra.mxu0 %v526
        %528 = vmatprep.subr.mxu0 0.0
        %529 = vmatpush2.msra.mxu0 0.0
        %530 = vmatprep.subr.mxu0 0.0
        %531 = vmatpush2.msra.mxu0 0.0
        %532 = vmatprep.subr.mxu0 0.0
        %533 = vmatpush2.msra.mxu0 0.0
        %534 = vmatprep.subr.mxu0 0.0
        %535 = vmatpush2.msra.mxu0 0.0
        %536 = vmatprep.subr.mxu0 0.0
        %537 = vmatpush2.msra.mxu0 0.0
        %538 = vmatprep.subr.mxu0 0.0
        %539 = vmatpush2.msra.mxu0 0.0
        %540 = vmatprep.subr.mxu0 0.0
        %541 = vmatpush2.msra.mxu0 0.0
        %542 = vmatprep.subr.mxu0 0.0
        %543 = vmatpush2.msra.mxu0 0.0
        %544 = vmatprep.subr.mxu0 0.0
        %545 = vmatpush2.msra.mxu0 0.0
        %546 = vmatprep.subr.mxu0 0.0
        %547 = vmatpush2.msra.mxu0 0.0
        %548 = vmatprep.subr.mxu0 0.0
        %549 = vmatpush2.msra.mxu0 0.0
        %550 = vmatprep.subr.mxu0 0.0
        %551 = vmatpush2.msra.mxu0 0.0
        %552 = vmatprep.subr.mxu0 0.0
        %553 = vmatpush2.msra.mxu0 0.0
        %554 = vmatprep.subr.mxu0 0.0
        %555 = vmatpush2.msra.mxu0 0.0
        %556 = vmatprep.subr.mxu0 0.0
        %557 = vmatpush2.msra.mxu0 0.0
        %558 = vmatprep.subr.mxu0 0.0
        %559 = vmatpush2.msra.mxu0 0.0
        %560 = vmatprep.mubr.f32.mxu0 0.0
        %v561 = vand.u32 %v179, 4294901760
        %562 = vmatmul.mubr.f32.gmra.mxu0 %v561
        %v563 = vpop.f32.mrf.mxu0
        %v564 = vadd.f32 %v487, %v563
        %v565 = vpop.f32.mrf.mxu0
        %566 = vdwg.mxu0
        %567 = vmatprep.subr.mxu0 0.0
        %568 = vmatpush1.msra.mxu0 0.0
        %569 = vmatprep.subr.mxu0 0.0
        %570 = vmatpush1.msra.mxu0 0.0
        %571 = vmatprep.subr.mxu0 0.0
        %572 = vmatpush1.msra.mxu0 0.0
        %573 = vmatprep.subr.mxu0 0.0
        %574 = vmatpush1.msra.mxu0 0.0
        %575 = vmatprep.subr.mxu0 0.0
        %576 = vmatpush1.msra.mxu0 0.0
        %577 = vmatprep.subr.mxu0 0.0
        %578 = vmatpush1.msra.mxu0 0.0
        %579 = vmatprep.subr.mxu0 0.0
        %580 = vmatpush1.msra.mxu0 0.0
        %581 = vmatprep.subr.mxu0 0.0
        %582 = vmatpush1.msra.mxu0 0.0
        %583 = vmatprep.subr.mxu0 0.0
        %584 = vmatpush1.msra.mxu0 0.0
        %585 = vmatprep.subr.mxu0 0.0
        %586 = vmatpush1.msra.mxu0 0.0
        %587 = vmatprep.subr.mxu0 0.0
        %588 = vmatpush1.msra.mxu0 0.0
        %589 = vmatprep.subr.mxu0 0.0
        %590 = vmatpush1.msra.mxu0 0.0
        %591 = vmatprep.subr.mxu0 0.0
        %592 = vmatpush1.msra.mxu0 0.0
        %593 = vmatprep.subr.mxu0 0.0
        %594 = vmatpush1.msra.mxu0 0.0
        %595 = vmatprep.subr.mxu0 0.0
        %v596 = vand.u32 %v176, 4294901760
        %597 = vmatpush1.msra.mxu0 %v596
        %598 = vmatprep.subr.mxu0 0.0
        %v599 = vand.u32 %v175, 4294901760
        %600 = vmatpush1.msra.mxu0 %v599
        %601 = vmatprep.subr.mxu0 0.0
        %602 = vmatpush2.msra.mxu0 0.0
        %603 = vmatprep.subr.mxu0 0.0
        %604 = vmatpush2.msra.mxu0 0.0
        %605 = vmatprep.subr.mxu0 0.0
        %606 = vmatpush2.msra.mxu0 0.0
        %607 = vmatprep.subr.mxu0 0.0
        %608 = vmatpush2.msra.mxu0 0.0
        %609 = vmatprep.subr.mxu0 0.0
        %610 = vmatpush2.msra.mxu0 0.0
        %611 = vmatprep.subr.mxu0 0.0
        %612 = vmatpush2.msra.mxu0 0.0
        %613 = vmatprep.subr.mxu0 0.0
        %614 = vmatpush2.msra.mxu0 0.0
        %615 = vmatprep.subr.mxu0 0.0
        %616 = vmatpush2.msra.mxu0 0.0
        %617 = vmatprep.subr.mxu0 0.0
        %618 = vmatpush2.msra.mxu0 0.0
        %619 = vmatprep.subr.mxu0 0.0
        %620 = vmatpush2.msra.mxu0 0.0
        %621 = vmatprep.subr.mxu0 0.0
        %622 = vmatpush2.msra.mxu0 0.0
        %623 = vmatprep.subr.mxu0 0.0
        %624 = vmatpush2.msra.mxu0 0.0
        %625 = vmatprep.subr.mxu0 0.0
        %626 = vmatpush2.msra.mxu0 0.0
        %627 = vmatprep.subr.mxu0 0.0
        %628 = vmatpush2.msra.mxu0 0.0
        %629 = vmatprep.subr.mxu0 0.0
        %630 = vmatpush2.msra.mxu0 0.0
        %631 = vmatprep.subr.mxu0 0.0
        %632 = vmatpush2.msra.mxu0 0.0
        %633 = vmatprep.mubr.f32.mxu0 0.0
        %v634 = vand.u32 %v179, 4294901760
        %635 = vmatmul.mubr.f32.gmra.mxu0 %v634
        %v636 = vpop.f32.mrf.mxu0
        %v637 = vadd.f32 %v564, %v636
        %v638 = vpop.f32.mrf.mxu0
        %639 = vdwg.mxu0
        %640 = vst.msk [vmem:[%s173] sm:$0xff] %vm177, %v637
        %s641 = sand.u32 %s75, 1
        %s642 = scalar_lea.sflag [#allocation4], %s641
        %s643 = sand.u32 %s75, 1
        %s644 = smul.addr %s643, 8
        %s645 = scalar_lea.vmem [#allocation7], %s644
        // Predicated region
        $region37: #{tpu_custom_call.1} parent=27 // pred_check
          %p646 = pneg %p85
        $region38: #{tpu_custom_call.1} parent=27 // pred_check_branch
          %648 = sbr.rel (%p646) target = $region40
        $region39: #{tpu_custom_call.1} parent=27 // pred_region
          %s650 = ssub.s32 128, 128
          %651 = vsyncadd %s642, %s650
          %s652 = smul.addr %s20, 128
          %s653 = scalar_lea.hbm %s2, %s652
          %s655 = sshll.u32 %s645, 4
          %s656 = int_to_ptr.vmem [resolvable:$true] %s655
          %658 = dma.vmem_to_hbm [thread:$0]  %s656, 128, %s653, %s642
        $region40: #{tpu_custom_call.1} parent=27 // pred_fallthru
          _
      $region28: #{tpu_custom_call.1} parent=5 // pred_fallthru
        _
      %p659 = scmp.le.s32.totalorder 2, %s15
      // Predicated region
      $region41: #{tpu_custom_call.1} parent=5 // pred_check
        %p660 = pneg %p659
      $region42: #{tpu_custom_call.1} parent=5 // pred_check_branch
        %662 = sbr.rel (%p660) target = $region44
      $region43: #{tpu_custom_call.1} parent=5 // pred_region
        %s663 = ssub.s32 %s15, 2
        // Predicated region
        $region45: #{tpu_custom_call.1} parent=43 // pred_check
          %p664 = pneg %p91
        $region46: #{tpu_custom_call.1} parent=43 // pred_check_branch
          %666 = sbr.rel (%p664) target = $region48
        $region47: #{tpu_custom_call.1} parent=43 // pred_region
          %s667 = sand.u32 %s76, 1
          %s668 = scalar_lea.sflag [#allocation4], %s667
          %s669 = sand.u32 %s76, 1
          %s670 = smul.addr %s669, 8
          %s671 = scalar_lea.vmem [#allocation7], %s670
          %672 = dma.done %s668, 128
        $region48: #{tpu_custom_call.1} parent=43 // pred_fallthru
          _
      $region44: #{tpu_custom_call.1} parent=5 // pred_fallthru
        _
    $region6: #{tpu_custom_call.1} parent=1 // loop_footer
      %s19 = sadd.s32 1, %s15
    $region7: #{tpu_custom_call.1} parent=1 // loop_footer_branch
      %14 = sbr.rel target = $region3
    $region8: #{tpu_custom_call.1} parent=1 // loop_exit
      _
    %673 = vsyncpa [#allocation3], 1
    %s674 = scalar_lea.sflag [#allocation3], 1
    %675 = vsyncpa %s674, 1
    %676 = vsyncpa [#allocation6], 1
    %677 = vsyncpa [#allocation4], 1
    %s678 = scalar_lea.sflag [#allocation4], 1
    %679 = vsyncpa %s678, 1

</llo_original>
